<compile_context>
chip_gen: v7x
topology: tpu7x:2x2x1
jax: 0.10.0
libtpu: 0.0.40
codegen_flags: <defaults>
</compile_context>

<pallas_src>
import numpy as np
import jax
import jax.numpy as jnp
from jax import lax
from jax.experimental import pallas as pl
from jax.experimental.pallas import tpu as pltpu


# ----------------------- anchor generation (plain numpy glue) -----------------------
def generate_anchor_base(base_size=16, ratios=(0.5, 1.0, 2.0), anchor_scales=(8, 16, 32)):
    py = base_size / 2.0
    px = base_size / 2.0
    ab = np.zeros((len(ratios) * len(anchor_scales), 4), dtype=np.float32)
    for i, r in enumerate(ratios):
        for j, s in enumerate(anchor_scales):
            h = base_size * s * np.sqrt(r)
            w = base_size * s * np.sqrt(1.0 / r)
            idx = i * len(anchor_scales) + j
            ab[idx, 0] = py - h / 2.0
            ab[idx, 1] = px - w / 2.0
            ab[idx, 2] = py + h / 2.0
            ab[idx, 3] = px + w / 2.0
    return ab


def generate_anchors(anchor_base, feat_size, n_anchors, feat_stride=16):
    H, W = feat_size
    shift_y = np.arange(0, H * feat_stride, feat_stride)
    shift_x = np.arange(0, W * feat_stride, feat_stride)
    sx, sy = np.meshgrid(shift_x, shift_y)
    shift = np.stack((sy.ravel(), sx.ravel(), sy.ravel(), sx.ravel()), axis=1)
    K = shift.shape[0]
    anchors = anchor_base.reshape(1, n_anchors, 4) + shift.reshape(K, 1, 4)
    return jnp.asarray(anchors.reshape(K * n_anchors, 4).astype(np.float32))


def _round_up(x, m):
    return ((x + m - 1) // m) * m


# ------------------------------------ kernel ---------------------------------------
def _rpn_kernel(xt_ref, w3t_ref, b3_ref, wh_ref, bh_ref, out_ref):
    # xt_ref : (9*C_in, T)      bf16, im2col'd input tile; lane axis = flat (b, y, x)
    # w3t_ref: (C_mid, 9*C_in)  bf16, 3x3 conv weight flattened over (tap, C_in)
    # b3_ref : (C_mid, 1)       f32
    # wh_ref : (A_pad, C_mid)   bf16, merged + row-padded objectness/regression heads
    # bh_ref : (A_pad, 1)       f32
    # out_ref: (A_pad, T)       f32, lane-dense output tile
    shared = jnp.dot(w3t_ref[...], xt_ref[...],
                     preferred_element_type=jnp.float32)          # MXU, f32 accum
    shared = jnp.maximum(shared + b3_ref[...], 0.0)               # bias + ReLU in f32
    out_ref[...] = jnp.dot(wh_ref[...], shared.astype(jnp.bfloat16),
                           preferred_element_type=jnp.float32) + bh_ref[...]


def _const_spec(shape):
    """BlockSpec for a grid-invariant (resident) operand; single-buffered if supported."""
    index_map = lambda s: (0,) * len(shape)
    if hasattr(pl, "Buffered"):
        try:
            return pl.BlockSpec(shape, index_map, pipeline_mode=pl.Buffered(1))
        except Exception:
            pass
    return pl.BlockSpec(shape, index_map)


def _plain_spec(shape):
    return pl.BlockSpec(shape, lambda s: (0,) * len(shape))


def _rpn_matmul(xt_flat, w3t, b3, wh, bh, *, tile, resident_weights):
    K, N = xt_flat.shape
    C_mid = w3t.shape[0]
    A_pad = wh.shape[0]

    flops = 2 * N * (K * C_mid + C_mid * A_pad)
    bytes_accessed = (xt_flat.size * 2 + w3t.size * 2 + wh.size * 2
                      + b3.size * 4 + bh.size * 4 + A_pad * N * 4)
    cost = pl.CostEstimate(flops=flops, transcendentals=0, bytes_accessed=bytes_accessed)

    # Explicit VMEM budget: ~3x the per-step tiles (bf16 input + f32 shared + f32 out)
    # plus doubled weights, with slack.  Safe on v5e (16 MiB scoped default) and under
    # v7x's 64 MiB physical VMEM at both toy and realistic RPN sizes.
    tile_bytes = K * tile * 2 + C_mid * tile * 4 + A_pad * tile * 4
    weight_bytes = (w3t.size + wh.size) * 2 + (b3.size + bh.size) * 4
    vmem_limit = int(min(max(3 * tile_bytes + 2 * weight_bytes + (2 << 20), 8 << 20),
                         64 << 20))

    wspec = _const_spec if resident_weights else _plain_spec

    return pl.pallas_call(
        _rpn_kernel,
        out_shape=jax.ShapeDtypeStruct((A_pad, N), jnp.float32),
        grid_spec=pltpu.PrefetchScalarGridSpec(
            num_scalar_prefetch=0,
            grid=(N // tile,),
            in_specs=[
                pl.BlockSpec((K, tile), lambda s: (0, s)),
                wspec((C_mid, K)),
                wspec((C_mid, 1)),
                wspec((A_pad, C_mid)),
                wspec((A_pad, 1)),
            ],
            out_specs=pl.BlockSpec((A_pad, tile), lambda s: (0, s)),
        ),
        compiler_params=pltpu.CompilerParams(
            dimension_semantics=("parallel",),   # spatial tiles shard across TCs (v7x)
            vmem_limit_bytes=vmem_limit,
        ),
        cost_estimate=cost,
    )(xt_flat, w3t, b3, wh, bh)


def rpn_forward(x_nchw, params, n_anchors, anchor_base):
    B, C_in, H, W = x_nchw.shape
    w3t, b3, wh, bh = params              # f32 master copies, layout-transformed/padded
    A2 = n_anchors * 2
    A4 = n_anchors * 4
    A_tot = A2 + A4
    A_pad = wh.shape[0]
    HW = H * W
    K = 9 * C_in

    # im2col once in the wrapper: one K = 9*C_in matmul instead of nine K = C_in dots.
    # xt[b, t*C_in + c, y*W + x] = x_pad[b, c, y+dy, x+dx], tap index t = dy*3 + dx.
    x_pad = jnp.pad(x_nchw, ((0, 0), (0, 0), (1, 1), (1, 1)))
    taps = [x_pad[:, :, dy:dy + H, dx:dx + W] for dy in range(3) for dx in range(3)]
    xt = jnp.stack(taps, axis=1).reshape(B, K, HW)

    # Lane-dense, 128-aligned spatial axis with batch folded into the lanes.
    HW_pad = _round_up(HW, 128)
    xt = jnp.pad(xt, ((0, 0), (0, 0), (0, HW_pad - HW)))
    N = B * HW_pad
    xt_flat = jnp.transpose(xt, (1, 0, 2)).reshape(K, N).astype(jnp.bfloat16)

    tile = 512
    while N % tile:
        tile //= 2                        # HW_pad is a multiple of 128, so tile >= 128

    w3t_b = w3t.astype(jnp.bfloat16)
    wh_b = wh.astype(jnp.bfloat16)

    try:
        out_flat = _rpn_matmul(xt_flat, w3t_b, b3, wh_b, bh,
                               tile=tile, resident_weights=True)
        out_flat = jax.block_until_ready(out_flat)
    except Exception:
        # Fallback for jax versions without single-buffered pipeline_mode support.
        out_flat = _rpn_matmul(xt_flat, w3t_b, b3, wh_b, bh,
                               tile=tile, resident_weights=False)

    # (A_pad, B*HW_pad) -> (B, HW, A_tot); channel order matches PyTorch's
    # permute(0, 2, 3, 1), so the final head views are pure reshapes.
    out = out_flat.reshape(A_pad, B, HW_pad)[:A_tot, :, :HW]
    out_t = jnp.transpose(out, (1, 2, 0))
    objectness = out_t[:, :, :A2].reshape(B, HW * n_anchors, 2)
    regression = out_t[:, :, A2:].reshape(B, HW * n_anchors, 4)
    anchors = generate_anchors(anchor_base, (H, W), n_anchors)
    return objectness, regression, anchors


# --------------------------- deterministic parameter init --------------------------
def init_params(key, in_channels, mid_channels, n_anchors):
    k1, k2, k3 = jax.random.split(key, 3)
    # PyTorch weight layouts: (out, in, kh, kw); biases = 0; normal(std=0.01).
    w_conv = 0.01 * jax.random.normal(k1, (mid_channels, in_channels, 3, 3), jnp.float32)
    w_obj = 0.01 * jax.random.normal(k2, (n_anchors * 2, mid_channels, 1, 1), jnp.float32)
    w_reg = 0.01 * jax.random.normal(k3, (n_anchors * 4, mid_channels, 1, 1), jnp.float32)
    # Kernel layout: w3t[m, (ky*3+kx)*C_in + c] = w_conv[m, c, ky, kx] -> (C_mid, 9*C_in)
    w3t = jnp.transpose(w_conv, (0, 2, 3, 1)).reshape(mid_channels, 9 * in_channels)
    b3 = jnp.zeros((mid_channels, 1), jnp.float32)
    # Merged head (objectness rows first, regression rows second), zero-padded to a
    # sublane-friendly row count; padded rows are sliced off in the wrapper.
    a_tot = n_anchors * 6
    a_pad = _round_up(a_tot, 16)
    wh = jnp.concatenate(
        [w_obj[:, :, 0, 0], w_reg[:, :, 0, 0],
         jnp.zeros((a_pad - a_tot, mid_channels), jnp.float32)], axis=0)
    bh = jnp.zeros((a_pad, 1), jnp.float32)
    return (w3t, b3, wh, bh), (w_conv, w_obj, w_reg)


# ----------------------------- pure-JAX reference check -----------------------------
def rpn_reference(x_nchw, torch_weights, n_anchors):
    w_conv, w_obj, w_reg = torch_weights
    dn = ("NCHW", "OIHW", "NCHW")
    shared = jnp.maximum(
        lax.conv_general_dilated(x_nchw, w_conv, (1, 1), ((1, 1), (1, 1)),
                                 dimension_numbers=dn), 0.0)
    obj = lax.conv_general_dilated(shared, w_obj, (1, 1), "VALID", dimension_numbers=dn)
    reg = lax.conv_general_dilated(shared, w_reg, (1, 1), "VALID", dimension_numbers=dn)
    B = x_nchw.shape[0]
    obj = jnp.transpose(obj, (0, 2, 3, 1)).reshape(B, -1, 2)
    reg = jnp.transpose(reg, (0, 2, 3, 1)).reshape(B, -1, 4)
    return obj, reg


if __name__ == "__main__":
    in_channels, mid_channels = 4, 32
    ratios = (0.5, 1.0, 2.0)
    anchor_scales = (8, 16, 32)
    anchor_base = generate_anchor_base(ratios=ratios, anchor_scales=anchor_scales)
    n_anchors = anchor_base.shape[0]  # 9

    key = jax.random.PRNGKey(0)
    kx, kp = jax.random.split(key)
    x = jax.random.normal(kx, (2, in_channels, 16, 16), jnp.float32)  # NCHW like PyTorch
    params, torch_weights = init_params(kp, in_channels, mid_channels, n_anchors)

    objectness, regression, anchors = rpn_forward(x, params, n_anchors, anchor_base)
    jax.block_until_ready((objectness, regression, anchors))

    assert objectness.shape == (2, 16 * 16 * n_anchors, 2)
    assert regression.shape == (2, 16 * 16 * n_anchors, 4)
    assert anchors.shape == (16 * 16 * n_anchors, 4)

    obj_ref, reg_ref = rpn_reference(x, torch_weights, n_anchors)
    # bf16 MXU operands with f32 accumulation: slightly looser tolerance than pure f32.
    assert jnp.allclose(objectness, obj_ref, atol=2e-3, rtol=2e-2)
    assert jnp.allclose(regression, reg_ref, atol=2e-3, rtol=2e-2)

    print("KERNEL_OK")
</pallas_src>

<mosaic_0001>
module attributes {stable_mosaic.version = 11 : i64} {
  func.func @_rpn_kernel(%arg0: i32, %arg1: memref<36x512xbf16, #tpu.memory_space<vmem>>, %arg2: memref<32x36xbf16, #tpu.memory_space<vmem>>, %arg3: memref<32x1xf32, #tpu.memory_space<vmem>>, %arg4: memref<64x32xbf16, #tpu.memory_space<vmem>>, %arg5: memref<64x1xf32, #tpu.memory_space<vmem>>, %arg6: memref<64x512xf32, #tpu.memory_space<vmem>>) attributes {dimension_semantics = [#tpu.dimension_semantics<parallel>], iteration_bounds = array<i64: 1>, scalar_prefetch = 0 : i64, scratch_operands = 0 : i64, tpu.core_type = #tpu.core_type<tc>, window_params = [{transform_indices = @transform_0, window_bounds = array<i64: 36, 512>}, {pipeline_mode = #tpu.pipeline_mode<synchronous>, transform_indices = @transform_1, window_bounds = array<i64: 32, 36>}, {pipeline_mode = #tpu.pipeline_mode<synchronous>, transform_indices = @transform_2, window_bounds = array<i64: 32, 1>}, {pipeline_mode = #tpu.pipeline_mode<synchronous>, transform_indices = @transform_3, window_bounds = array<i64: 64, 32>}, {pipeline_mode = #tpu.pipeline_mode<synchronous>, transform_indices = @transform_4, window_bounds = array<i64: 64, 1>}, {transform_indices = @transform_5, window_bounds = array<i64: 64, 512>}]} {
    %c0 = arith.constant 0 : index
    %c0_0 = arith.constant 0 : index
    %0 = vector.load %arg2[%c0, %c0_0] : memref<32x36xbf16, #tpu.memory_space<vmem>>, vector<32x36xbf16>
    %c0_1 = arith.constant 0 : index
    %c0_2 = arith.constant 0 : index
    %1 = vector.load %arg1[%c0_1, %c0_2] : memref<36x512xbf16, #tpu.memory_space<vmem>>, vector<36x512xbf16>
    %cst = arith.constant dense<0.000000e+00> : vector<32x512xf32>
    %2 = tpu.matmul %0, %1, %cst {dimension_numbers = #tpu.dot_dimension_numbers<[1], [0], [0], [1], [0, 0, 1, 1], [], []>} : vector<32x36xbf16>, vector<36x512xbf16>, vector<32x512xf32> -> vector<32x512xf32>
    %c0_3 = arith.constant 0 : index
    %c0_4 = arith.constant 0 : index
    %3 = vector.load %arg3[%c0_3, %c0_4] : memref<32x1xf32, #tpu.memory_space<vmem>>, vector<32x1xf32>
    %4 = vector.broadcast %3 : vector<32x1xf32> to vector<32x512xf32>
    %5 = arith.addf %2, %4 : vector<32x512xf32>
    %cst_5 = arith.constant 0.000000e+00 : f32
    %6 = vector.broadcast %cst_5 : f32 to vector<32x512xf32>
    %7 = arith.maximumf %5, %6 : vector<32x512xf32>
    %c0_6 = arith.constant 0 : index
    %c0_7 = arith.constant 0 : index
    %8 = vector.load %arg4[%c0_6, %c0_7] : memref<64x32xbf16, #tpu.memory_space<vmem>>, vector<64x32xbf16>
    %9 = arith.truncf %7 : vector<32x512xf32> to vector<32x512xbf16>
    %cst_8 = arith.constant dense<0.000000e+00> : vector<64x512xf32>
    %10 = tpu.matmul %8, %9, %cst_8 {dimension_numbers = #tpu.dot_dimension_numbers<[1], [0], [0], [1], [0, 0, 1, 1], [], []>} : vector<64x32xbf16>, vector<32x512xbf16>, vector<64x512xf32> -> vector<64x512xf32>
    %c0_9 = arith.constant 0 : index
    %c0_10 = arith.constant 0 : index
    %11 = vector.load %arg5[%c0_9, %c0_10] : memref<64x1xf32, #tpu.memory_space<vmem>>, vector<64x1xf32>
    %12 = vector.broadcast %11 : vector<64x1xf32> to vector<64x512xf32>
    %13 = arith.addf %10, %12 : vector<64x512xf32>
    %c0_11 = arith.constant 0 : index
    %c0_12 = arith.constant 0 : index
    %14 = vector.load %arg6[%c0_11, %c0_12] : memref<64x512xf32, #tpu.memory_space<vmem>>, vector<64x512xf32>
    tpu.vector_store %arg6[%c0_11, %c0_12], %13 {strides = array<i32>} : memref<64x512xf32, #tpu.memory_space<vmem>>, vector<64x512xf32>,
    return
  }
  func.func @transform_0(%arg0: i32) -> (i32, i32) {
    %c0_i32 = arith.constant 0 : i32
    %c0_i32_0 = arith.constant 0 : i32
    return %c0_i32, %arg0 : i32, i32
  }
  func.func @transform_1(%arg0: i32) -> (i32, i32) {
    %c0_i32 = arith.constant 0 : i32
    %c0_i32_0 = arith.constant 0 : i32
    %c0_i32_1 = arith.constant 0 : i32
    return %c0_i32, %c0_i32_0 : i32, i32
  }
  func.func @transform_2(%arg0: i32) -> (i32, i32) {
    %c0_i32 = arith.constant 0 : i32
    %c0_i32_0 = arith.constant 0 : i32
    %c0_i32_1 = arith.constant 0 : i32
    return %c0_i32, %c0_i32_0 : i32, i32
  }
  func.func @transform_3(%arg0: i32) -> (i32, i32) {
    %c0_i32 = arith.constant 0 : i32
    %c0_i32_0 = arith.constant 0 : i32
    %c0_i32_1 = arith.constant 0 : i32
    return %c0_i32, %c0_i32_0 : i32, i32
  }
  func.func @transform_4(%arg0: i32) -> (i32, i32) {
    %c0_i32 = arith.constant 0 : i32
    %c0_i32_0 = arith.constant 0 : i32
    %c0_i32_1 = arith.constant 0 : i32
    return %c0_i32, %c0_i32_0 : i32, i32
  }
  func.func @transform_5(%arg0: i32) -> (i32, i32) {
    %c0_i32 = arith.constant 0 : i32
    %c0_i32_0 = arith.constant 0 : i32
    return %c0_i32, %arg0 : i32, i32
  }
}

module attributes {stable_mosaic.version = 11 : i64} {
  func.func @_rpn_kernel(%arg0: i32, %arg1: memref<36x512xbf16, #tpu.memory_space<vmem>>, %arg2: memref<32x36xbf16, #tpu.memory_space<vmem>>, %arg3: memref<32x1xf32, #tpu.memory_space<vmem>>, %arg4: memref<64x32xbf16, #tpu.memory_space<vmem>>, %arg5: memref<64x1xf32, #tpu.memory_space<vmem>>, %arg6: memref<64x512xf32, #tpu.memory_space<vmem>>) attributes {dimension_semantics = [#tpu.dimension_semantics<parallel>], iteration_bounds = array<i64: 1>, scalar_prefetch = 0 : i64, scratch_operands = 0 : i64, tpu.core_type = #tpu.core_type<tc>, window_params = [{transform_indices = @transform_0, window_bounds = array<i64: 36, 512>}, {pipeline_mode = #tpu.pipeline_mode<synchronous>, transform_indices = @transform_1, window_bounds = array<i64: 32, 36>}, {pipeline_mode = #tpu.pipeline_mode<synchronous>, transform_indices = @transform_2, window_bounds = array<i64: 32, 1>}, {pipeline_mode = #tpu.pipeline_mode<synchronous>, transform_indices = @transform_3, window_bounds = array<i64: 64, 32>}, {pipeline_mode = #tpu.pipeline_mode<synchronous>, transform_indices = @transform_4, window_bounds = array<i64: 64, 1>}, {transform_indices = @transform_5, window_bounds = array<i64: 64, 512>}]} {
    %c0 = arith.constant 0 : index
    %c0_0 = arith.constant 0 : index
    %0 = vector.load %arg2[%c0, %c0_0] : memref<32x36xbf16, #tpu.memory_space<vmem>>, vector<32x36xbf16>
    %c0_1 = arith.constant 0 : index
    %c0_2 = arith.constant 0 : index
    %1 = vector.load %arg1[%c0_1, %c0_2] : memref<36x512xbf16, #tpu.memory_space<vmem>>, vector<36x512xbf16>
    %cst = arith.constant dense<0.000000e+00> : vector<32x512xf32>
    %2 = tpu.matmul %0, %1, %cst {dimension_numbers = #tpu.dot_dimension_numbers<[1], [0], [0], [1], [0, 0, 1, 1], [], []>} : vector<32x36xbf16>, vector<36x512xbf16>, vector<32x512xf32> -> vector<32x512xf32>
    %c0_3 = arith.constant 0 : index
    %c0_4 = arith.constant 0 : index
    %3 = vector.load %arg3[%c0_3, %c0_4] : memref<32x1xf32, #tpu.memory_space<vmem>>, vector<32x1xf32>
    %4 = vector.broadcast %3 : vector<32x1xf32> to vector<32x512xf32>
    %5 = arith.addf %2, %4 : vector<32x512xf32>
    %cst_5 = arith.constant 0.000000e+00 : f32
    %6 = vector.broadcast %cst_5 : f32 to vector<32x512xf32>
    %7 = arith.maximumf %5, %6 : vector<32x512xf32>
    %c0_6 = arith.constant 0 : index
    %c0_7 = arith.constant 0 : index
    %8 = vector.load %arg4[%c0_6, %c0_7] : memref<64x32xbf16, #tpu.memory_space<vmem>>, vector<64x32xbf16>
    %9 = arith.truncf %7 : vector<32x512xf32> to vector<32x512xbf16>
    %cst_8 = arith.constant dense<0.000000e+00> : vector<64x512xf32>
    %10 = tpu.matmul %8, %9, %cst_8 {dimension_numbers = #tpu.dot_dimension_numbers<[1], [0], [0], [1], [0, 0, 1, 1], [], []>} : vector<64x32xbf16>, vector<32x512xbf16>, vector<64x512xf32> -> vector<64x512xf32>
    %c0_9 = arith.constant 0 : index
    %c0_10 = arith.constant 0 : index
    %11 = vector.load %arg5[%c0_9, %c0_10] : memref<64x1xf32, #tpu.memory_space<vmem>>, vector<64x1xf32>
    %12 = vector.broadcast %11 : vector<64x1xf32> to vector<64x512xf32>
    %13 = arith.addf %10, %12 : vector<64x512xf32>
    %c0_11 = arith.constant 0 : index
    %c0_12 = arith.constant 0 : index
    %14 = vector.load %arg6[%c0_11, %c0_12] : memref<64x512xf32, #tpu.memory_space<vmem>>, vector<64x512xf32>
    tpu.vector_store %arg6[%c0_11, %c0_12], %13 {strides = array<i32>} : memref<64x512xf32, #tpu.memory_space<vmem>>, vector<64x512xf32>,
    return
  }
  func.func @transform_0(%arg0: i32) -> (i32, i32) {
    %c0_i32 = arith.constant 0 : i32
    %c0_i32_0 = arith.constant 0 : i32
    return %c0_i32, %arg0 : i32, i32
  }
  func.func @transform_1(%arg0: i32) -> (i32, i32) {
    %c0_i32 = arith.constant 0 : i32
    %c0_i32_0 = arith.constant 0 : i32
    %c0_i32_1 = arith.constant 0 : i32
    return %c0_i32, %c0_i32_0 : i32, i32
  }
  func.func @transform_2(%arg0: i32) -> (i32, i32) {
    %c0_i32 = arith.constant 0 : i32
    %c0_i32_0 = arith.constant 0 : i32
    %c0_i32_1 = arith.constant 0 : i32
    return %c0_i32, %c0_i32_0 : i32, i32
  }
  func.func @transform_3(%arg0: i32) -> (i32, i32) {
    %c0_i32 = arith.constant 0 : i32
    %c0_i32_0 = arith.constant 0 : i32
    %c0_i32_1 = arith.constant 0 : i32
    return %c0_i32, %c0_i32_0 : i32, i32
  }
  func.func @transform_4(%arg0: i32) -> (i32, i32) {
    %c0_i32 = arith.constant 0 : i32
    %c0_i32_0 = arith.constant 0 : i32
    %c0_i32_1 = arith.constant 0 : i32
    return %c0_i32, %c0_i32_0 : i32, i32
  }
  func.func @transform_5(%arg0: i32) -> (i32, i32) {
    %c0_i32 = arith.constant 0 : i32
    %c0_i32_0 = arith.constant 0 : i32
    return %c0_i32, %arg0 : i32, i32
  }
}

</mosaic_0001>

<llo_original>
// kernel: tpu_custom_call.1
$region0: #{tpu_custom_call.1}
  #allocation0 [shape = 'u32[]', space=smem, size = 0x4, offset = 0x4, fixed_abs, tag = 'smem constant byte address 0x4 - core index']
  #allocation1 [shape = 'u32[144,128]{1,0:T(1,128)}', space=vmem, size = 0x12000, scoped, tag = 'internal scratch']
  %s0 = inlined_call_operand.vmem [shape: bf16[36,512], index: 0, kind: input, shape index: {}]
  %s1 = inlined_call_operand.vmem [shape: bf16[32,36], index: 1, kind: input, shape index: {}]
  %s2 = inlined_call_operand.vmem [shape: f32[32,1], index: 2, kind: input, shape index: {}]
  %s3 = inlined_call_operand.vmem [shape: bf16[64,32], index: 3, kind: input, shape index: {}]
  %s4 = inlined_call_operand.vmem [shape: f32[64,1], index: 4, kind: input, shape index: {}]
  %s5 = inlined_call_operand.hbm [shape: f32[64,512], index: 5, kind: output, shape index: {}]
  %s6 = sld [smem:[#allocation0]]
  $region30: #{tpu_custom_call.1} parent=0
    _
  %s8 = ssub.s32 1, %s6
  %s9 = scalar_select 0, %s8, %s6
  $region1: #{tpu_custom_call.1} parent=0
    #allocation2 [shape = 'u8[131072]{0}', space=vmem, size = 0x20000, scoped, tag = 'output window, operand 0, single buffered']
    #allocation3 [shape = 's32[1]{0}', space=sflag, size = 0x4, scoped, tag = 'scoped memory for tpu_custom_call.1']
    %10 = vsyncpa [#allocation3], 0
    // Predicated region
    $region2: #{tpu_custom_call.1} parent=1 // pred_check
      _
    $region3: #{tpu_custom_call.1} parent=1 // pred_check_branch
      %12 = sbr.rel (0) target = $region5
    $region4: #{tpu_custom_call.1} parent=1 // pred_region
      _
    $region5: #{tpu_custom_call.1} parent=1 // pred_fallthru
      _
    // Predicated region
    $region6: #{tpu_custom_call.1} parent=1 // pred_check
      _
    $region7: #{tpu_custom_call.1} parent=1 // pred_check_branch
      %14 = sbr.rel (0) target = $region9
    $region8: #{tpu_custom_call.1} parent=1 // pred_region
      _
    $region9: #{tpu_custom_call.1} parent=1 // pred_fallthru
      _
    // Predicated region
    $region10: #{tpu_custom_call.1} parent=1 // pred_check
      _
    $region11: #{tpu_custom_call.1} parent=1 // pred_check_branch
      %16 = sbr.rel (0) target = $region13
    $region12: #{tpu_custom_call.1} parent=1 // pred_region
      _
    $region13: #{tpu_custom_call.1} parent=1 // pred_fallthru
      _
    // Predicated region
    $region14: #{tpu_custom_call.1} parent=1 // pred_check
      _
    $region15: #{tpu_custom_call.1} parent=1 // pred_check_branch
      %18 = sbr.rel (0) target = $region17
    $region16: #{tpu_custom_call.1} parent=1 // pred_region
      _
    $region17: #{tpu_custom_call.1} parent=1 // pred_fallthru
      _
    // Predicated region
    $region18: #{tpu_custom_call.1} parent=1 // pred_check
      _
    $region19: #{tpu_custom_call.1} parent=1 // pred_check_branch
      %20 = sbr.rel (0) target = $region21
    $region20: #{tpu_custom_call.1} parent=1 // pred_region
      _
    $region21: #{tpu_custom_call.1} parent=1 // pred_fallthru
      _
    %v22 = vld [vmem:[%s1] sm:$0xf]
    %v23 = vld [vmem:[%s1 + $0x4] sm:$0xf]
    %v24 = vld [vmem:[%s1 + $0x8] sm:$0xf]
    %v25 = vld [vmem:[%s1 + $0xc] sm:$0xf]
    %v26 = vld [vmem:[%s0] sm:$0xff]
    %v27 = vld [vmem:[%s0 + $0x8] sm:$0xff]
    %v28 = vld [vmem:[%s0 + $0x10] sm:$0xff]
    %v29 = vld [vmem:[%s0 + $0x18] sm:$0xff]
    %v30 = vld [vmem:[%s0 + $0x20] sm:$0xff]
    %v31 = vld [vmem:[%s0 + $0x28] sm:$0xff]
    %v32 = vld [vmem:[%s0 + $0x30] sm:$0xff]
    %v33 = vld [vmem:[%s0 + $0x38] sm:$0xff]
    %v34 = vld [vmem:[%s0 + $0x40] sm:$0x33]
    %v35 = vld [vmem:[%s0 + $0x48] sm:$0x33]
    %v36 = vld [vmem:[%s2] sm:$0xff]
    %v37 = vld [vmem:[%s2 + $0x8] sm:$0xff]
    %v38 = vld [vmem:[%s2 + $0x10] sm:$0xff]
    %v39 = vld [vmem:[%s2 + $0x18] sm:$0xff]
    %41 = vset.pattern.permute.xlu0 0
    %42 = vperm.xlu0 %41, %v36
    %v43 = vpop.permute.xlu0 %42
    %46 = vset.pattern.permute.xlu0 0
    %47 = vperm.xlu0 %46, %v37
    %v48 = vpop.permute.xlu0 %47
    %51 = vset.pattern.permute.xlu0 0
    %52 = vperm.xlu0 %51, %v38
    %v53 = vpop.permute.xlu0 %52
    %56 = vset.pattern.permute.xlu0 0
    %57 = vperm.xlu0 %56, %v39
    %v58 = vpop.permute.xlu0 %57
    %v64 = vunpack.c.l.b16 %v22
    %v65 = vunpack.c.l.b16 %v23
    %v66 = vunpack.c.l.b16 %v24
    %v67 = vunpack.c.l.b16 %v25
    %v68 = vpack.c.b16 %v65, %v64
    %v69 = vpack.c.b16 %v67, %v66
    %v80 = vunpack.c.l.b16 %v26
    %v81 = vunpack.c.h.b16 %v26
    %v82 = vunpack.c.l.b16 %v27
    %v83 = vunpack.c.h.b16 %v27
    %v84 = vunpack.c.l.b16 %v28
    %v85 = vunpack.c.h.b16 %v28
    %v86 = vunpack.c.l.b16 %v29
    %v87 = vunpack.c.h.b16 %v29
    %v88 = vunpack.c.l.b16 %v30
    %v89 = vunpack.c.h.b16 %v30
    %v90 = vunpack.c.l.b16 %v31
    %v91 = vunpack.c.h.b16 %v31
    %v92 = vunpack.c.l.b16 %v32
    %v93 = vunpack.c.h.b16 %v32
    %v94 = vunpack.c.l.b16 %v33
    %v95 = vunpack.c.h.b16 %v33
    %v96 = vunpack.c.l.b16 %v34
    %v97 = vunpack.c.h.b16 %v34
    %v98 = vunpack.c.l.b16 %v35
    %v99 = vunpack.c.h.b16 %v35
    %v100 = vpack.c.b16 %v84, %v80
    %v101 = vpack.c.b16 %v85, %v81
    %v102 = vpack.c.b16 %v86, %v82
    %v103 = vpack.c.b16 %v87, %v83
    %v104 = vpack.c.b16 %v92, %v88
    %v105 = vpack.c.b16 %v93, %v89
    %v106 = vpack.c.b16 %v94, %v90
    %v107 = vpack.c.b16 %v95, %v91
    %v108 = vpack.c.b16 %v96, %v96
    %v109 = vpack.c.b16 %v97, %v97
    %v110 = vpack.c.b16 %v98, %v98
    %v111 = vpack.c.b16 %v99, %v99
    %vm120 = vcmask 293888
    %v122 = vsel %vm120, %v68, 0
    %v125 = vsel %vm120, %v69, 0
    %vm127 = vcmask 1041408
    %v129 = vsel %vm127, %v108, 0
    %v132 = vsel %vm127, %v109, 0
    %v135 = vsel %vm127, %v110, 0
    %v138 = vsel %vm127, %v111, 0
    %140 = vmatprep.subr.bf16.mxu0 %v101
    %141 = vmatpush1.bf16.msra.mxu0 %v100
    %142 = vmatprep.subr.bf16.mxu0 %v105
    %143 = vmatpush1.bf16.msra.mxu0 %v104
    %144 = vmatprep.subr.bf16.mxu0 %v132
    %145 = vmatpush1.bf16.msra.mxu0 %v129
    %146 = vmatprep.subr.bf16.mxu0 0
    %147 = vmatpush1.bf16.msra.mxu0 0
    %148 = vmatprep.subr.bf16.mxu0 0
    %149 = vmatpush1.bf16.msra.mxu0 0
    %150 = vmatprep.subr.bf16.mxu0 0
    %151 = vmatpush1.bf16.msra.mxu0 0
    %152 = vmatprep.subr.bf16.mxu0 0
    %153 = vmatpush1.bf16.msra.mxu0 0
    %154 = vmatprep.subr.bf16.mxu0 0
    %155 = vmatpush1.bf16.msra.mxu0 0
    %156 = vmatprep.subr.bf16.mxu0 0
    %157 = vmatpush1.bf16.msra.mxu0 0
    %158 = vmatprep.subr.bf16.mxu0 0
    %159 = vmatpush1.bf16.msra.mxu0 0
    %160 = vmatprep.subr.bf16.mxu0 0
    %161 = vmatpush1.bf16.msra.mxu0 0
    %162 = vmatprep.subr.bf16.mxu0 0
    %163 = vmatpush1.bf16.msra.mxu0 0
    %164 = vmatprep.subr.bf16.mxu0 0
    %165 = vmatpush1.bf16.msra.mxu0 0
    %166 = vmatprep.subr.bf16.mxu0 0
    %167 = vmatpush1.bf16.msra.mxu0 0
    %168 = vmatprep.subr.bf16.mxu0 0
    %169 = vmatpush1.bf16.msra.mxu0 0
    %170 = vmatprep.subr.bf16.mxu0 0
    %171 = vmatpush1.bf16.msra.mxu0 0
    %172 = vmatprep.mubr.bf16.mxu0 0
    %173 = vmatmul.mubr.bf16.gmra.mrb[0].mxu0 %v122
    %v174 = vpop.f32.mrb[0].mxu0
    %v175 = vadd.f32 %v43, %v174
    %v176 = vpop.f32.mrb[0].mxu0
    %v177 = vadd.f32 %v43, %v176
    %v178 = vpop.f32.mrb[0].mxu0
    %v179 = vadd.f32 %v48, %v178
    %v180 = vpop.f32.mrb[0].mxu0
    %v181 = vadd.f32 %v48, %v180
    %182 = vmatprep.mubr.bf16.mxu0 0
    %183 = vmatmul.mubr.bf16.gmra.mrb[0].mxu0 %v125
    %v184 = vpop.f32.mrb[0].mxu0
    %v185 = vadd.f32 %v53, %v184
    %v186 = vpop.f32.mrb[0].mxu0
    %v187 = vadd.f32 %v53, %v186
    %v188 = vpop.f32.mrb[0].mxu0
    %v189 = vadd.f32 %v58, %v188
    %v190 = vpop.f32.mrb[0].mxu0
    %v191 = vadd.f32 %v58, %v190
    %192 = vdwg.mxu0
    %193 = vmatprep.subr.bf16.mxu0 %v103
    %194 = vmatpush1.bf16.msra.mxu0 %v102
    %195 = vmatprep.subr.bf16.mxu0 %v107
    %196 = vmatpush1.bf16.msra.mxu0 %v106
    %197 = vmatprep.subr.bf16.mxu0 %v138
    %198 = vmatpush1.bf16.msra.mxu0 %v135
    %199 = vmatprep.subr.bf16.mxu0 0
    %200 = vmatpush1.bf16.msra.mxu0 0
    %201 = vmatprep.subr.bf16.mxu0 0
    %202 = vmatpush1.bf16.msra.mxu0 0
    %203 = vmatprep.subr.bf16.mxu0 0
    %204 = vmatpush1.bf16.msra.mxu0 0
    %205 = vmatprep.subr.bf16.mxu0 0
    %206 = vmatpush1.bf16.msra.mxu0 0
    %207 = vmatprep.subr.bf16.mxu0 0
    %208 = vmatpush1.bf16.msra.mxu0 0
    %209 = vmatprep.subr.bf16.mxu0 0
    %210 = vmatpush1.bf16.msra.mxu0 0
    %211 = vmatprep.subr.bf16.mxu0 0
    %212 = vmatpush1.bf16.msra.mxu0 0
    %213 = vmatprep.subr.bf16.mxu0 0
    %214 = vmatpush1.bf16.msra.mxu0 0
    %215 = vmatprep.subr.bf16.mxu0 0
    %216 = vmatpush1.bf16.msra.mxu0 0
    %217 = vmatprep.subr.bf16.mxu0 0
    %218 = vmatpush1.bf16.msra.mxu0 0
    %219 = vmatprep.subr.bf16.mxu0 0
    %220 = vmatpush1.bf16.msra.mxu0 0
    %221 = vmatprep.subr.bf16.mxu0 0
    %222 = vmatpush1.bf16.msra.mxu0 0
    %223 = vmatprep.subr.bf16.mxu0 0
    %224 = vmatpush1.bf16.msra.mxu0 0
    %225 = vmatprep.mubr.bf16.mxu0 0
    %226 = vmatmul.mubr.bf16.gmra.mrb[0].mxu0 %v122
    %v227 = vpop.f32.mrb[0].mxu0
    %v228 = vadd.f32 %v43, %v227
    %v229 = vpop.f32.mrb[0].mxu0
    %v230 = vadd.f32 %v43, %v229
    %v231 = vpop.f32.mrb[0].mxu0
    %v232 = vadd.f32 %v48, %v231
    %v233 = vpop.f32.mrb[0].mxu0
    %v234 = vadd.f32 %v48, %v233
    %235 = vmatprep.mubr.bf16.mxu0 0
    %236 = vmatmul.mubr.bf16.gmra.mrb[0].mxu0 %v125
    %v237 = vpop.f32.mrb[0].mxu0
    %v238 = vadd.f32 %v53, %v237
    %v239 = vpop.f32.mrb[0].mxu0
    %v240 = vadd.f32 %v53, %v239
    %v241 = vpop.f32.mrb[0].mxu0
    %v242 = vadd.f32 %v58, %v241
    %v243 = vpop.f32.mrb[0].mxu0
    %v244 = vadd.f32 %v58, %v243
    %245 = vdwg.mxu0
    %v246 = vmax.f32 %v175, 0.0
    %v247 = vmax.f32 %v177, 0.0
    %v248 = vmax.f32 %v228, 0.0
    %v249 = vmax.f32 %v230, 0.0
    %v250 = vmax.f32 %v179, 0.0
    %v251 = vmax.f32 %v181, 0.0
    %v252 = vmax.f32 %v232, 0.0
    %v253 = vmax.f32 %v234, 0.0
    %v254 = vmax.f32 %v185, 0.0
    %v255 = vmax.f32 %v187, 0.0
    %v256 = vmax.f32 %v238, 0.0
    %v257 = vmax.f32 %v240, 0.0
    %v258 = vmax.f32 %v189, 0.0
    %v259 = vmax.f32 %v191, 0.0
    %v260 = vmax.f32 %v242, 0.0
    %v261 = vmax.f32 %v244, 0.0
    %v262 = vld [vmem:[%s3] sm:$0xf]
    %v263 = vld [vmem:[%s3 + $0x4] sm:$0xf]
    %v264 = vld [vmem:[%s3 + $0x8] sm:$0xf]
    %v265 = vld [vmem:[%s3 + $0xc] sm:$0xf]
    %v266 = vld [vmem:[%s3 + $0x10] sm:$0xf]
    %v267 = vld [vmem:[%s3 + $0x14] sm:$0xf]
    %v268 = vld [vmem:[%s3 + $0x18] sm:$0xf]
    %v269 = vld [vmem:[%s3 + $0x1c] sm:$0xf]
    %v270 = vpack.c.bf16 %v250, %v246
    %v271 = vpack.c.bf16 %v251, %v247
    %v272 = vpack.c.bf16 %v252, %v248
    %v273 = vpack.c.bf16 %v253, %v249
    %v274 = vpack.c.bf16 %v258, %v254
    %v275 = vpack.c.bf16 %v259, %v255
    %v276 = vpack.c.bf16 %v260, %v256
    %v277 = vpack.c.bf16 %v261, %v257
    %v278 = vld [vmem:[%s4] sm:$0xff]
    %v279 = vld [vmem:[%s4 + $0x8] sm:$0xff]
    %v280 = vld [vmem:[%s4 + $0x10] sm:$0xff]
    %v281 = vld [vmem:[%s4 + $0x18] sm:$0xff]
    %v282 = vld [vmem:[%s4 + $0x20] sm:$0xff]
    %v283 = vld [vmem:[%s4 + $0x28] sm:$0xff]
    %v284 = vld [vmem:[%s4 + $0x30] sm:$0xff]
    %v285 = vld [vmem:[%s4 + $0x38] sm:$0xff]
    %287 = vset.pattern.permute.xlu0 0
    %288 = vperm.xlu0 %287, %v278
    %v289 = vpop.permute.xlu0 %288
    %292 = vset.pattern.permute.xlu0 0
    %293 = vperm.xlu0 %292, %v279
    %v294 = vpop.permute.xlu0 %293
    %297 = vset.pattern.permute.xlu0 0
    %298 = vperm.xlu0 %297, %v280
    %v299 = vpop.permute.xlu0 %298
    %302 = vset.pattern.permute.xlu0 0
    %303 = vperm.xlu0 %302, %v281
    %v304 = vpop.permute.xlu0 %303
    %307 = vset.pattern.permute.xlu0 0
    %308 = vperm.xlu0 %307, %v282
    %v309 = vpop.permute.xlu0 %308
    %312 = vset.pattern.permute.xlu0 0
    %313 = vperm.xlu0 %312, %v283
    %v314 = vpop.permute.xlu0 %313
    %317 = vset.pattern.permute.xlu0 0
    %318 = vperm.xlu0 %317, %v284
    %v319 = vpop.permute.xlu0 %318
    %322 = vset.pattern.permute.xlu0 0
    %323 = vperm.xlu0 %322, %v285
    %v324 = vpop.permute.xlu0 %323
    %v334 = vunpack.c.l.b16 %v262
    %v335 = vunpack.c.l.b16 %v263
    %v336 = vunpack.c.l.b16 %v264
    %v337 = vunpack.c.l.b16 %v265
    %v338 = vunpack.c.l.b16 %v266
    %v339 = vunpack.c.l.b16 %v267
    %v340 = vunpack.c.l.b16 %v268
    %v341 = vunpack.c.l.b16 %v269
    %v342 = vpack.c.b16 %v335, %v334
    %v343 = vpack.c.b16 %v337, %v336
    %v344 = vpack.c.b16 %v339, %v338
    %v345 = vpack.c.b16 %v341, %v340
    %vm346 = vcmask 261120
    %v348 = vsel %vm346, %v342, 0
    %v351 = vsel %vm346, %v343, 0
    %v354 = vsel %vm346, %v344, 0
    %v357 = vsel %vm346, %v345, 0
    %359 = vmatprep.subr.bf16.mxu0 %v271
    %360 = vmatpush1.bf16.msra.mxu0 %v270
    %361 = vmatprep.subr.bf16.mxu0 %v275
    %362 = vmatpush1.bf16.msra.mxu0 %v274
    %363 = vmatprep.subr.bf16.mxu0 0
    %364 = vmatpush1.bf16.msra.mxu0 0
    %365 = vmatprep.subr.bf16.mxu0 0
    %366 = vmatpush1.bf16.msra.mxu0 0
    %367 = vmatprep.subr.bf16.mxu0 0
    %368 = vmatpush1.bf16.msra.mxu0 0
    %369 = vmatprep.subr.bf16.mxu0 0
    %370 = vmatpush1.bf16.msra.mxu0 0
    %371 = vmatprep.subr.bf16.mxu0 0
    %372 = vmatpush1.bf16.msra.mxu0 0
    %373 = vmatprep.subr.bf16.mxu0 0
    %374 = vmatpush1.bf16.msra.mxu0 0
    %375 = vmatprep.subr.bf16.mxu0 0
    %376 = vmatpush1.bf16.msra.mxu0 0
    %377 = vmatprep.subr.bf16.mxu0 0
    %378 = vmatpush1.bf16.msra.mxu0 0
    %379 = vmatprep.subr.bf16.mxu0 0
    %380 = vmatpush1.bf16.msra.mxu0 0
    %381 = vmatprep.subr.bf16.mxu0 0
    %382 = vmatpush1.bf16.msra.mxu0 0
    %383 = vmatprep.subr.bf16.mxu0 0
    %384 = vmatpush1.bf16.msra.mxu0 0
    %385 = vmatprep.subr.bf16.mxu0 0
    %386 = vmatpush1.bf16.msra.mxu0 0
    %387 = vmatprep.subr.bf16.mxu0 0
    %388 = vmatpush1.bf16.msra.mxu0 0
    %389 = vmatprep.subr.bf16.mxu0 0
    %390 = vmatpush1.bf16.msra.mxu0 0
    %391 = vmatprep.mubr.bf16.mxu0 0
    %392 = vmatmul.mubr.bf16.gmra.mrb[0].mxu0 %v348
    %v393 = vpop.f32.mrb[0].mxu0
    %v394 = vadd.f32 %v289, %v393
    %v395 = vpop.f32.mrb[0].mxu0
    %v396 = vadd.f32 %v289, %v395
    %v397 = vpop.f32.mrb[0].mxu0
    %v398 = vadd.f32 %v294, %v397
    %v399 = vpop.f32.mrb[0].mxu0
    %v400 = vadd.f32 %v294, %v399
    %401 = vmatprep.mubr.bf16.mxu0 0
    %402 = vmatmul.mubr.bf16.gmra.mrb[0].mxu0 %v351
    %v403 = vpop.f32.mrb[0].mxu0
    %v404 = vadd.f32 %v299, %v403
    %v405 = vpop.f32.mrb[0].mxu0
    %v406 = vadd.f32 %v299, %v405
    %v407 = vpop.f32.mrb[0].mxu0
    %v408 = vadd.f32 %v304, %v407
    %v409 = vpop.f32.mrb[0].mxu0
    %v410 = vadd.f32 %v304, %v409
    %411 = vmatprep.mubr.bf16.mxu0 0
    %412 = vmatmul.mubr.bf16.gmra.mrb[0].mxu0 %v354
    %v413 = vpop.f32.mrb[0].mxu0
    %v414 = vadd.f32 %v309, %v413
    %v415 = vpop.f32.mrb[0].mxu0
    %v416 = vadd.f32 %v309, %v415
    %v417 = vpop.f32.mrb[0].mxu0
    %v418 = vadd.f32 %v314, %v417
    %v419 = vpop.f32.mrb[0].mxu0
    %v420 = vadd.f32 %v314, %v419
    %421 = vmatprep.mubr.bf16.mxu0 0
    %422 = vmatmul.mubr.bf16.gmra.mrb[0].mxu0 %v357
    %v423 = vpop.f32.mrb[0].mxu0
    %v424 = vadd.f32 %v319, %v423
    %v425 = vpop.f32.mrb[0].mxu0
    %v426 = vadd.f32 %v319, %v425
    %v427 = vpop.f32.mrb[0].mxu0
    %v428 = vadd.f32 %v324, %v427
    %v429 = vpop.f32.mrb[0].mxu0
    %v430 = vadd.f32 %v324, %v429
    %431 = vdwg.mxu0
    %432 = vmatprep.subr.bf16.mxu0 %v273
    %433 = vmatpush1.bf16.msra.mxu0 %v272
    %434 = vmatprep.subr.bf16.mxu0 %v277
    %435 = vmatpush1.bf16.msra.mxu0 %v276
    %436 = vmatprep.subr.bf16.mxu0 0
    %437 = vmatpush1.bf16.msra.mxu0 0
    %438 = vmatprep.subr.bf16.mxu0 0
    %439 = vmatpush1.bf16.msra.mxu0 0
    %440 = vmatprep.subr.bf16.mxu0 0
    %441 = vmatpush1.bf16.msra.mxu0 0
    %442 = vmatprep.subr.bf16.mxu0 0
    %443 = vmatpush1.bf16.msra.mxu0 0
    %444 = vmatprep.subr.bf16.mxu0 0
    %445 = vmatpush1.bf16.msra.mxu0 0
    %446 = vmatprep.subr.bf16.mxu0 0
    %447 = vmatpush1.bf16.msra.mxu0 0
    %448 = vmatprep.subr.bf16.mxu0 0
    %449 = vmatpush1.bf16.msra.mxu0 0
    %450 = vmatprep.subr.bf16.mxu0 0
    %451 = vmatpush1.bf16.msra.mxu0 0
    %452 = vmatprep.subr.bf16.mxu0 0
    %453 = vmatpush1.bf16.msra.mxu0 0
    %454 = vmatprep.subr.bf16.mxu0 0
    %455 = vmatpush1.bf16.msra.mxu0 0
    %456 = vmatprep.subr.bf16.mxu0 0
    %457 = vmatpush1.bf16.msra.mxu0 0
    %458 = vmatprep.subr.bf16.mxu0 0
    %459 = vmatpush1.bf16.msra.mxu0 0
    %460 = vmatprep.subr.bf16.mxu0 0
    %461 = vmatpush1.bf16.msra.mxu0 0
    %462 = vmatprep.subr.bf16.mxu0 0
    %463 = vmatpush1.bf16.msra.mxu0 0
    %464 = vmatprep.mubr.bf16.mxu0 0
    %465 = vmatmul.mubr.bf16.gmra.mrb[0].mxu0 %v348
    %v466 = vpop.f32.mrb[0].mxu0
    %v467 = vadd.f32 %v289, %v466
    %v468 = vpop.f32.mrb[0].mxu0
    %v469 = vadd.f32 %v289, %v468
    %v470 = vpop.f32.mrb[0].mxu0
    %v471 = vadd.f32 %v294, %v470
    %v472 = vpop.f32.mrb[0].mxu0
    %v473 = vadd.f32 %v294, %v472
    %474 = vmatprep.mubr.bf16.mxu0 0
    %475 = vmatmul.mubr.bf16.gmra.mrb[0].mxu0 %v351
    %v476 = vpop.f32.mrb[0].mxu0
    %v477 = vadd.f32 %v299, %v476
    %v478 = vpop.f32.mrb[0].mxu0
    %v479 = vadd.f32 %v299, %v478
    %v480 = vpop.f32.mrb[0].mxu0
    %v481 = vadd.f32 %v304, %v480
    %v482 = vpop.f32.mrb[0].mxu0
    %v483 = vadd.f32 %v304, %v482
    %484 = vmatprep.mubr.bf16.mxu0 0
    %485 = vmatmul.mubr.bf16.gmra.mrb[0].mxu0 %v354
    %v486 = vpop.f32.mrb[0].mxu0
    %v487 = vadd.f32 %v309, %v486
    %v488 = vpop.f32.mrb[0].mxu0
    %v489 = vadd.f32 %v309, %v488
    %v490 = vpop.f32.mrb[0].mxu0
    %v491 = vadd.f32 %v314, %v490
    %v492 = vpop.f32.mrb[0].mxu0
    %v493 = vadd.f32 %v314, %v492
    %494 = vmatprep.mubr.bf16.mxu0 0
    %495 = vmatmul.mubr.bf16.gmra.mrb[0].mxu0 %v357
    %v496 = vpop.f32.mrb[0].mxu0
    %v497 = vadd.f32 %v319, %v496
    %v498 = vpop.f32.mrb[0].mxu0
    %v499 = vadd.f32 %v319, %v498
    %v500 = vpop.f32.mrb[0].mxu0
    %v501 = vadd.f32 %v324, %v500
    %v502 = vpop.f32.mrb[0].mxu0
    %v503 = vadd.f32 %v324, %v502
    %504 = vdwg.mxu0
    %505 = vst [vmem:[#allocation2] sm:$0xff] %v394
    %506 = vst [vmem:[#allocation2 + $0x8] sm:$0xff] %v396
    %507 = vst [vmem:[#allocation2 + $0x10] sm:$0xff] %v467
    %508 = vst [vmem:[#allocation2 + $0x18] sm:$0xff] %v469
    %509 = vst [vmem:[#allocation2 + $0x20] sm:$0xff] %v398
    %510 = vst [vmem:[#allocation2 + $0x28] sm:$0xff] %v400
    %511 = vst [vmem:[#allocation2 + $0x30] sm:$0xff] %v471
    %512 = vst [vmem:[#allocation2 + $0x38] sm:$0xff] %v473
    %513 = vst [vmem:[#allocation2 + $0x40] sm:$0xff] %v404
    %514 = vst [vmem:[#allocation2 + $0x48] sm:$0xff] %v406
    %515 = vst [vmem:[#allocation2 + $0x50] sm:$0xff] %v477
    %516 = vst [vmem:[#allocation2 + $0x58] sm:$0xff] %v479
    %517 = vst [vmem:[#allocation2 + $0x60] sm:$0xff] %v408
    %518 = vst [vmem:[#allocation2 + $0x68] sm:$0xff] %v410
    %519 = vst [vmem:[#allocation2 + $0x70] sm:$0xff] %v481
    %520 = vst [vmem:[#allocation2 + $0x78] sm:$0xff] %v483
    %521 = vst [vmem:[#allocation2 + $0x80] sm:$0xff] %v414
    %522 = vst [vmem:[#allocation2 + $0x88] sm:$0xff] %v416
    %523 = vst [vmem:[#allocation2 + $0x90] sm:$0xff] %v487
    %524 = vst [vmem:[#allocation2 + $0x98] sm:$0xff] %v489
    %525 = vst [vmem:[#allocation2 + $0xa0] sm:$0xff] %v418
    %526 = vst [vmem:[#allocation2 + $0xa8] sm:$0xff] %v420
    %527 = vst [vmem:[#allocation2 + $0xb0] sm:$0xff] %v491
    %528 = vst [vmem:[#allocation2 + $0xb8] sm:$0xff] %v493
    %529 = vst [vmem:[#allocation2 + $0xc0] sm:$0xff] %v424
    %530 = vst [vmem:[#allocation2 + $0xc8] sm:$0xff] %v426
    %531 = vst [vmem:[#allocation2 + $0xd0] sm:$0xff] %v497
    %532 = vst [vmem:[#allocation2 + $0xd8] sm:$0xff] %v499
    %533 = vst [vmem:[#allocation2 + $0xe0] sm:$0xff] %v428
    %534 = vst [vmem:[#allocation2 + $0xe8] sm:$0xff] %v430
    %535 = vst [vmem:[#allocation2 + $0xf0] sm:$0xff] %v501
    %536 = vst [vmem:[#allocation2 + $0xf8] sm:$0xff] %v503
    // Predicated region
    $region22: #{tpu_custom_call.1} parent=1 // pred_check
      _
    $region23: #{tpu_custom_call.1} parent=1 // pred_check_branch
      %538 = sbr.rel (0) target = $region25
    $region24: #{tpu_custom_call.1} parent=1 // pred_region
      %s540 = ssub.s32 4096, 4096
      %541 = vsyncadd [#allocation3], %s540
      %s542 = sshll.u32 [#allocation2], 4
      %s543 = int_to_ptr.vmem [resolvable:$true] %s542
      %548 = dma.vmem_to_hbm [thread:$0]  %s543, 4096, %s5, [#allocation3], 512, 512, 32
    $region25: #{tpu_custom_call.1} parent=1 // pred_fallthru
      _
    // Predicated region
    $region26: #{tpu_custom_call.1} parent=1 // pred_check
      _
    $region27: #{tpu_custom_call.1} parent=1 // pred_check_branch
      %550 = sbr.rel (0) target = $region29
    $region28: #{tpu_custom_call.1} parent=1 // pred_region
      %551 = dma.done [#allocation3], 4096
    $region29: #{tpu_custom_call.1} parent=1 // pred_fallthru
      _
    %552 = vsyncpa [#allocation3], 1

// kernel: tpu_custom_call.1
$region0: #{tpu_custom_call.1}
  #allocation0 [shape = 'u32[]', space=smem, size = 0x4, offset = 0x4, fixed_abs, tag = 'smem constant byte address 0x4 - core index']
  #allocation1 [shape = 'u32[144,128]{1,0:T(1,128)}', space=vmem, size = 0x12000, scoped, tag = 'internal scratch']
  %s0 = inlined_call_operand.vmem [shape: bf16[36,512], index: 0, kind: input, shape index: {}]
  %s1 = inlined_call_operand.vmem [shape: bf16[32,36], index: 1, kind: input, shape index: {}]
  %s2 = inlined_call_operand.vmem [shape: f32[32,1], index: 2, kind: input, shape index: {}]
  %s3 = inlined_call_operand.vmem [shape: bf16[64,32], index: 3, kind: input, shape index: {}]
  %s4 = inlined_call_operand.vmem [shape: f32[64,1], index: 4, kind: input, shape index: {}]
  %s5 = inlined_call_operand.hbm [shape: f32[64,512], index: 5, kind: output, shape index: {}]
  %s6 = sld [smem:[#allocation0]]
  $region30: #{tpu_custom_call.1} parent=0
    _
  %s8 = ssub.s32 1, %s6
  %s9 = scalar_select 0, %s8, %s6
  $region1: #{tpu_custom_call.1} parent=0
    #allocation2 [shape = 'u8[131072]{0}', space=vmem, size = 0x20000, scoped, tag = 'output window, operand 0, single buffered']
    #allocation3 [shape = 's32[1]{0}', space=sflag, size = 0x4, scoped, tag = 'scoped memory for tpu_custom_call.1']
    %10 = vsyncpa [#allocation3], 0
    // Predicated region
    $region2: #{tpu_custom_call.1} parent=1 // pred_check
      _
    $region3: #{tpu_custom_call.1} parent=1 // pred_check_branch
      %12 = sbr.rel (0) target = $region5
    $region4: #{tpu_custom_call.1} parent=1 // pred_region
      _
    $region5: #{tpu_custom_call.1} parent=1 // pred_fallthru
      _
    // Predicated region
    $region6: #{tpu_custom_call.1} parent=1 // pred_check
      _
    $region7: #{tpu_custom_call.1} parent=1 // pred_check_branch
      %14 = sbr.rel (0) target = $region9
    $region8: #{tpu_custom_call.1} parent=1 // pred_region
      _
    $region9: #{tpu_custom_call.1} parent=1 // pred_fallthru
      _
    // Predicated region
    $region10: #{tpu_custom_call.1} parent=1 // pred_check
      _
    $region11: #{tpu_custom_call.1} parent=1 // pred_check_branch
      %16 = sbr.rel (0) target = $region13
    $region12: #{tpu_custom_call.1} parent=1 // pred_region
      _
    $region13: #{tpu_custom_call.1} parent=1 // pred_fallthru
      _
    // Predicated region
    $region14: #{tpu_custom_call.1} parent=1 // pred_check
      _
    $region15: #{tpu_custom_call.1} parent=1 // pred_check_branch
      %18 = sbr.rel (0) target = $region17
    $region16: #{tpu_custom_call.1} parent=1 // pred_region
      _
    $region17: #{tpu_custom_call.1} parent=1 // pred_fallthru
      _
    // Predicated region
    $region18: #{tpu_custom_call.1} parent=1 // pred_check
      _
    $region19: #{tpu_custom_call.1} parent=1 // pred_check_branch
      %20 = sbr.rel (0) target = $region21
    $region20: #{tpu_custom_call.1} parent=1 // pred_region
      _
    $region21: #{tpu_custom_call.1} parent=1 // pred_fallthru
      _
    %v22 = vld [vmem:[%s1] sm:$0xf]
    %v23 = vld [vmem:[%s1 + $0x4] sm:$0xf]
    %v24 = vld [vmem:[%s1 + $0x8] sm:$0xf]
    %v25 = vld [vmem:[%s1 + $0xc] sm:$0xf]
    %v26 = vld [vmem:[%s0] sm:$0xff]
    %v27 = vld [vmem:[%s0 + $0x8] sm:$0xff]
    %v28 = vld [vmem:[%s0 + $0x10] sm:$0xff]
    %v29 = vld [vmem:[%s0 + $0x18] sm:$0xff]
    %v30 = vld [vmem:[%s0 + $0x20] sm:$0xff]
    %v31 = vld [vmem:[%s0 + $0x28] sm:$0xff]
    %v32 = vld [vmem:[%s0 + $0x30] sm:$0xff]
    %v33 = vld [vmem:[%s0 + $0x38] sm:$0xff]
    %v34 = vld [vmem:[%s0 + $0x40] sm:$0x33]
    %v35 = vld [vmem:[%s0 + $0x48] sm:$0x33]
    %v36 = vld [vmem:[%s2] sm:$0xff]
    %v37 = vld [vmem:[%s2 + $0x8] sm:$0xff]
    %v38 = vld [vmem:[%s2 + $0x10] sm:$0xff]
    %v39 = vld [vmem:[%s2 + $0x18] sm:$0xff]
    %41 = vset.pattern.permute.xlu0 0
    %42 = vperm.xlu0 %41, %v36
    %v43 = vpop.permute.xlu0 %42
    %46 = vset.pattern.permute.xlu0 0
    %47 = vperm.xlu0 %46, %v37
    %v48 = vpop.permute.xlu0 %47
    %51 = vset.pattern.permute.xlu0 0
    %52 = vperm.xlu0 %51, %v38
    %v53 = vpop.permute.xlu0 %52
    %56 = vset.pattern.permute.xlu0 0
    %57 = vperm.xlu0 %56, %v39
    %v58 = vpop.permute.xlu0 %57
    %v64 = vunpack.c.l.b16 %v22
    %v65 = vunpack.c.l.b16 %v23
    %v66 = vunpack.c.l.b16 %v24
    %v67 = vunpack.c.l.b16 %v25
    %v68 = vpack.c.b16 %v65, %v64
    %v69 = vpack.c.b16 %v67, %v66
    %v80 = vunpack.c.l.b16 %v26
    %v81 = vunpack.c.h.b16 %v26
    %v82 = vunpack.c.l.b16 %v27
    %v83 = vunpack.c.h.b16 %v27
    %v84 = vunpack.c.l.b16 %v28
    %v85 = vunpack.c.h.b16 %v28
    %v86 = vunpack.c.l.b16 %v29
    %v87 = vunpack.c.h.b16 %v29
    %v88 = vunpack.c.l.b16 %v30
    %v89 = vunpack.c.h.b16 %v30
    %v90 = vunpack.c.l.b16 %v31
    %v91 = vunpack.c.h.b16 %v31
    %v92 = vunpack.c.l.b16 %v32
    %v93 = vunpack.c.h.b16 %v32
    %v94 = vunpack.c.l.b16 %v33
    %v95 = vunpack.c.h.b16 %v33
    %v96 = vunpack.c.l.b16 %v34
    %v97 = vunpack.c.h.b16 %v34
    %v98 = vunpack.c.l.b16 %v35
    %v99 = vunpack.c.h.b16 %v35
    %v100 = vpack.c.b16 %v84, %v80
    %v101 = vpack.c.b16 %v85, %v81
    %v102 = vpack.c.b16 %v86, %v82
    %v103 = vpack.c.b16 %v87, %v83
    %v104 = vpack.c.b16 %v92, %v88
    %v105 = vpack.c.b16 %v93, %v89
    %v106 = vpack.c.b16 %v94, %v90
    %v107 = vpack.c.b16 %v95, %v91
    %v108 = vpack.c.b16 %v96, %v96
    %v109 = vpack.c.b16 %v97, %v97
    %v110 = vpack.c.b16 %v98, %v98
    %v111 = vpack.c.b16 %v99, %v99
    %vm120 = vcmask 293888
    %v122 = vsel %vm120, %v68, 0
    %v125 = vsel %vm120, %v69, 0
    %vm127 = vcmask 1041408
    %v129 = vsel %vm127, %v108, 0
    %v132 = vsel %vm127, %v109, 0
    %v135 = vsel %vm127, %v110, 0
    %v138 = vsel %vm127, %v111, 0
    %140 = vmatprep.subr.bf16.mxu0 %v101
    %141 = vmatpush1.bf16.msra.mxu0 %v100
    %142 = vmatprep.subr.bf16.mxu0 %v105
    %143 = vmatpush1.bf16.msra.mxu0 %v104
    %144 = vmatprep.subr.bf16.mxu0 %v132
    %145 = vmatpush1.bf16.msra.mxu0 %v129
    %146 = vmatprep.subr.bf16.mxu0 0
    %147 = vmatpush1.bf16.msra.mxu0 0
    %148 = vmatprep.subr.bf16.mxu0 0
    %149 = vmatpush1.bf16.msra.mxu0 0
    %150 = vmatprep.subr.bf16.mxu0 0
    %151 = vmatpush1.bf16.msra.mxu0 0
    %152 = vmatprep.subr.bf16.mxu0 0
    %153 = vmatpush1.bf16.msra.mxu0 0
    %154 = vmatprep.subr.bf16.mxu0 0
    %155 = vmatpush1.bf16.msra.mxu0 0
    %156 = vmatprep.subr.bf16.mxu0 0
    %157 = vmatpush1.bf16.msra.mxu0 0
    %158 = vmatprep.subr.bf16.mxu0 0
    %159 = vmatpush1.bf16.msra.mxu0 0
    %160 = vmatprep.subr.bf16.mxu0 0
    %161 = vmatpush1.bf16.msra.mxu0 0
    %162 = vmatprep.subr.bf16.mxu0 0
    %163 = vmatpush1.bf16.msra.mxu0 0
    %164 = vmatprep.subr.bf16.mxu0 0
    %165 = vmatpush1.bf16.msra.mxu0 0
    %166 = vmatprep.subr.bf16.mxu0 0
    %167 = vmatpush1.bf16.msra.mxu0 0
    %168 = vmatprep.subr.bf16.mxu0 0
    %169 = vmatpush1.bf16.msra.mxu0 0
    %170 = vmatprep.subr.bf16.mxu0 0
    %171 = vmatpush1.bf16.msra.mxu0 0
    %172 = vmatprep.mubr.bf16.mxu0 0
    %173 = vmatmul.mubr.bf16.gmra.mrb[0].mxu0 %v122
    %v174 = vpop.f32.mrb[0].mxu0
    %v175 = vadd.f32 %v43, %v174
    %v176 = vpop.f32.mrb[0].mxu0
    %v177 = vadd.f32 %v43, %v176
    %v178 = vpop.f32.mrb[0].mxu0
    %v179 = vadd.f32 %v48, %v178
    %v180 = vpop.f32.mrb[0].mxu0
    %v181 = vadd.f32 %v48, %v180
    %182 = vmatprep.mubr.bf16.mxu0 0
    %183 = vmatmul.mubr.bf16.gmra.mrb[0].mxu0 %v125
    %v184 = vpop.f32.mrb[0].mxu0
    %v185 = vadd.f32 %v53, %v184
    %v186 = vpop.f32.mrb[0].mxu0
    %v187 = vadd.f32 %v53, %v186
    %v188 = vpop.f32.mrb[0].mxu0
    %v189 = vadd.f32 %v58, %v188
    %v190 = vpop.f32.mrb[0].mxu0
    %v191 = vadd.f32 %v58, %v190
    %192 = vdwg.mxu0
    %193 = vmatprep.subr.bf16.mxu0 %v103
    %194 = vmatpush1.bf16.msra.mxu0 %v102
    %195 = vmatprep.subr.bf16.mxu0 %v107
    %196 = vmatpush1.bf16.msra.mxu0 %v106
    %197 = vmatprep.subr.bf16.mxu0 %v138
    %198 = vmatpush1.bf16.msra.mxu0 %v135
    %199 = vmatprep.subr.bf16.mxu0 0
    %200 = vmatpush1.bf16.msra.mxu0 0
    %201 = vmatprep.subr.bf16.mxu0 0
    %202 = vmatpush1.bf16.msra.mxu0 0
    %203 = vmatprep.subr.bf16.mxu0 0
    %204 = vmatpush1.bf16.msra.mxu0 0
    %205 = vmatprep.subr.bf16.mxu0 0
    %206 = vmatpush1.bf16.msra.mxu0 0
    %207 = vmatprep.subr.bf16.mxu0 0
    %208 = vmatpush1.bf16.msra.mxu0 0
    %209 = vmatprep.subr.bf16.mxu0 0
    %210 = vmatpush1.bf16.msra.mxu0 0
    %211 = vmatprep.subr.bf16.mxu0 0
    %212 = vmatpush1.bf16.msra.mxu0 0
    %213 = vmatprep.subr.bf16.mxu0 0
    %214 = vmatpush1.bf16.msra.mxu0 0
    %215 = vmatprep.subr.bf16.mxu0 0
    %216 = vmatpush1.bf16.msra.mxu0 0
    %217 = vmatprep.subr.bf16.mxu0 0
    %218 = vmatpush1.bf16.msra.mxu0 0
    %219 = vmatprep.subr.bf16.mxu0 0
    %220 = vmatpush1.bf16.msra.mxu0 0
    %221 = vmatprep.subr.bf16.mxu0 0
    %222 = vmatpush1.bf16.msra.mxu0 0
    %223 = vmatprep.subr.bf16.mxu0 0
    %224 = vmatpush1.bf16.msra.mxu0 0
    %225 = vmatprep.mubr.bf16.mxu0 0
    %226 = vmatmul.mubr.bf16.gmra.mrb[0].mxu0 %v122
    %v227 = vpop.f32.mrb[0].mxu0
    %v228 = vadd.f32 %v43, %v227
    %v229 = vpop.f32.mrb[0].mxu0
    %v230 = vadd.f32 %v43, %v229
    %v231 = vpop.f32.mrb[0].mxu0
    %v232 = vadd.f32 %v48, %v231
    %v233 = vpop.f32.mrb[0].mxu0
    %v234 = vadd.f32 %v48, %v233
    %235 = vmatprep.mubr.bf16.mxu0 0
    %236 = vmatmul.mubr.bf16.gmra.mrb[0].mxu0 %v125
    %v237 = vpop.f32.mrb[0].mxu0
    %v238 = vadd.f32 %v53, %v237
    %v239 = vpop.f32.mrb[0].mxu0
    %v240 = vadd.f32 %v53, %v239
    %v241 = vpop.f32.mrb[0].mxu0
    %v242 = vadd.f32 %v58, %v241
    %v243 = vpop.f32.mrb[0].mxu0
    %v244 = vadd.f32 %v58, %v243
    %245 = vdwg.mxu0
    %v246 = vmax.f32 %v175, 0.0
    %v247 = vmax.f32 %v177, 0.0
    %v248 = vmax.f32 %v228, 0.0
    %v249 = vmax.f32 %v230, 0.0
    %v250 = vmax.f32 %v179, 0.0
    %v251 = vmax.f32 %v181, 0.0
    %v252 = vmax.f32 %v232, 0.0
    %v253 = vmax.f32 %v234, 0.0
    %v254 = vmax.f32 %v185, 0.0
    %v255 = vmax.f32 %v187, 0.0
    %v256 = vmax.f32 %v238, 0.0
    %v257 = vmax.f32 %v240, 0.0
    %v258 = vmax.f32 %v189, 0.0
    %v259 = vmax.f32 %v191, 0.0
    %v260 = vmax.f32 %v242, 0.0
    %v261 = vmax.f32 %v244, 0.0
    %v262 = vld [vmem:[%s3] sm:$0xf]
    %v263 = vld [vmem:[%s3 + $0x4] sm:$0xf]
    %v264 = vld [vmem:[%s3 + $0x8] sm:$0xf]
    %v265 = vld [vmem:[%s3 + $0xc] sm:$0xf]
    %v266 = vld [vmem:[%s3 + $0x10] sm:$0xf]
    %v267 = vld [vmem:[%s3 + $0x14] sm:$0xf]
    %v268 = vld [vmem:[%s3 + $0x18] sm:$0xf]
    %v269 = vld [vmem:[%s3 + $0x1c] sm:$0xf]
    %v270 = vpack.c.bf16 %v250, %v246
    %v271 = vpack.c.bf16 %v251, %v247
    %v272 = vpack.c.bf16 %v252, %v248
    %v273 = vpack.c.bf16 %v253, %v249
    %v274 = vpack.c.bf16 %v258, %v254
    %v275 = vpack.c.bf16 %v259, %v255
    %v276 = vpack.c.bf16 %v260, %v256
    %v277 = vpack.c.bf16 %v261, %v257
    %v278 = vld [vmem:[%s4] sm:$0xff]
    %v279 = vld [vmem:[%s4 + $0x8] sm:$0xff]
    %v280 = vld [vmem:[%s4 + $0x10] sm:$0xff]
    %v281 = vld [vmem:[%s4 + $0x18] sm:$0xff]
    %v282 = vld [vmem:[%s4 + $0x20] sm:$0xff]
    %v283 = vld [vmem:[%s4 + $0x28] sm:$0xff]
    %v284 = vld [vmem:[%s4 + $0x30] sm:$0xff]
    %v285 = vld [vmem:[%s4 + $0x38] sm:$0xff]
    %287 = vset.pattern.permute.xlu0 0
    %288 = vperm.xlu0 %287, %v278
    %v289 = vpop.permute.xlu0 %288
    %292 = vset.pattern.permute.xlu0 0
    %293 = vperm.xlu0 %292, %v279
    %v294 = vpop.permute.xlu0 %293
    %297 = vset.pattern.permute.xlu0 0
    %298 = vperm.xlu0 %297, %v280
    %v299 = vpop.permute.xlu0 %298
    %302 = vset.pattern.permute.xlu0 0
    %303 = vperm.xlu0 %302, %v281
    %v304 = vpop.permute.xlu0 %303
    %307 = vset.pattern.permute.xlu0 0
    %308 = vperm.xlu0 %307, %v282
    %v309 = vpop.permute.xlu0 %308
    %312 = vset.pattern.permute.xlu0 0
    %313 = vperm.xlu0 %312, %v283
    %v314 = vpop.permute.xlu0 %313
    %317 = vset.pattern.permute.xlu0 0
    %318 = vperm.xlu0 %317, %v284
    %v319 = vpop.permute.xlu0 %318
    %322 = vset.pattern.permute.xlu0 0
    %323 = vperm.xlu0 %322, %v285
    %v324 = vpop.permute.xlu0 %323
    %v334 = vunpack.c.l.b16 %v262
    %v335 = vunpack.c.l.b16 %v263
    %v336 = vunpack.c.l.b16 %v264
    %v337 = vunpack.c.l.b16 %v265
    %v338 = vunpack.c.l.b16 %v266
    %v339 = vunpack.c.l.b16 %v267
    %v340 = vunpack.c.l.b16 %v268
    %v341 = vunpack.c.l.b16 %v269
    %v342 = vpack.c.b16 %v335, %v334
    %v343 = vpack.c.b16 %v337, %v336
    %v344 = vpack.c.b16 %v339, %v338
    %v345 = vpack.c.b16 %v341, %v340
    %vm346 = vcmask 261120
    %v348 = vsel %vm346, %v342, 0
    %v351 = vsel %vm346, %v343, 0
    %v354 = vsel %vm346, %v344, 0
    %v357 = vsel %vm346, %v345, 0
    %359 = vmatprep.subr.bf16.mxu0 %v271
    %360 = vmatpush1.bf16.msra.mxu0 %v270
    %361 = vmatprep.subr.bf16.mxu0 %v275
    %362 = vmatpush1.bf16.msra.mxu0 %v274
    %363 = vmatprep.subr.bf16.mxu0 0
    %364 = vmatpush1.bf16.msra.mxu0 0
    %365 = vmatprep.subr.bf16.mxu0 0
    %366 = vmatpush1.bf16.msra.mxu0 0
    %367 = vmatprep.subr.bf16.mxu0 0
    %368 = vmatpush1.bf16.msra.mxu0 0
    %369 = vmatprep.subr.bf16.mxu0 0
    %370 = vmatpush1.bf16.msra.mxu0 0
    %371 = vmatprep.subr.bf16.mxu0 0
    %372 = vmatpush1.bf16.msra.mxu0 0
    %373 = vmatprep.subr.bf16.mxu0 0
    %374 = vmatpush1.bf16.msra.mxu0 0
    %375 = vmatprep.subr.bf16.mxu0 0
    %376 = vmatpush1.bf16.msra.mxu0 0
    %377 = vmatprep.subr.bf16.mxu0 0
    %378 = vmatpush1.bf16.msra.mxu0 0
    %379 = vmatprep.subr.bf16.mxu0 0
    %380 = vmatpush1.bf16.msra.mxu0 0
    %381 = vmatprep.subr.bf16.mxu0 0
    %382 = vmatpush1.bf16.msra.mxu0 0
    %383 = vmatprep.subr.bf16.mxu0 0
    %384 = vmatpush1.bf16.msra.mxu0 0
    %385 = vmatprep.subr.bf16.mxu0 0
    %386 = vmatpush1.bf16.msra.mxu0 0
    %387 = vmatprep.subr.bf16.mxu0 0
    %388 = vmatpush1.bf16.msra.mxu0 0
    %389 = vmatprep.subr.bf16.mxu0 0
    %390 = vmatpush1.bf16.msra.mxu0 0
    %391 = vmatprep.mubr.bf16.mxu0 0
    %392 = vmatmul.mubr.bf16.gmra.mrb[0].mxu0 %v348
    %v393 = vpop.f32.mrb[0].mxu0
    %v394 = vadd.f32 %v289, %v393
    %v395 = vpop.f32.mrb[0].mxu0
    %v396 = vadd.f32 %v289, %v395
    %v397 = vpop.f32.mrb[0].mxu0
    %v398 = vadd.f32 %v294, %v397
    %v399 = vpop.f32.mrb[0].mxu0
    %v400 = vadd.f32 %v294, %v399
    %401 = vmatprep.mubr.bf16.mxu0 0
    %402 = vmatmul.mubr.bf16.gmra.mrb[0].mxu0 %v351
    %v403 = vpop.f32.mrb[0].mxu0
    %v404 = vadd.f32 %v299, %v403
    %v405 = vpop.f32.mrb[0].mxu0
    %v406 = vadd.f32 %v299, %v405
    %v407 = vpop.f32.mrb[0].mxu0
    %v408 = vadd.f32 %v304, %v407
    %v409 = vpop.f32.mrb[0].mxu0
    %v410 = vadd.f32 %v304, %v409
    %411 = vmatprep.mubr.bf16.mxu0 0
    %412 = vmatmul.mubr.bf16.gmra.mrb[0].mxu0 %v354
    %v413 = vpop.f32.mrb[0].mxu0
    %v414 = vadd.f32 %v309, %v413
    %v415 = vpop.f32.mrb[0].mxu0
    %v416 = vadd.f32 %v309, %v415
    %v417 = vpop.f32.mrb[0].mxu0
    %v418 = vadd.f32 %v314, %v417
    %v419 = vpop.f32.mrb[0].mxu0
    %v420 = vadd.f32 %v314, %v419
    %421 = vmatprep.mubr.bf16.mxu0 0
    %422 = vmatmul.mubr.bf16.gmra.mrb[0].mxu0 %v357
    %v423 = vpop.f32.mrb[0].mxu0
    %v424 = vadd.f32 %v319, %v423
    %v425 = vpop.f32.mrb[0].mxu0
    %v426 = vadd.f32 %v319, %v425
    %v427 = vpop.f32.mrb[0].mxu0
    %v428 = vadd.f32 %v324, %v427
    %v429 = vpop.f32.mrb[0].mxu0
    %v430 = vadd.f32 %v324, %v429
    %431 = vdwg.mxu0
    %432 = vmatprep.subr.bf16.mxu0 %v273
    %433 = vmatpush1.bf16.msra.mxu0 %v272
    %434 = vmatprep.subr.bf16.mxu0 %v277
    %435 = vmatpush1.bf16.msra.mxu0 %v276
    %436 = vmatprep.subr.bf16.mxu0 0
    %437 = vmatpush1.bf16.msra.mxu0 0
    %438 = vmatprep.subr.bf16.mxu0 0
    %439 = vmatpush1.bf16.msra.mxu0 0
    %440 = vmatprep.subr.bf16.mxu0 0
    %441 = vmatpush1.bf16.msra.mxu0 0
    %442 = vmatprep.subr.bf16.mxu0 0
    %443 = vmatpush1.bf16.msra.mxu0 0
    %444 = vmatprep.subr.bf16.mxu0 0
    %445 = vmatpush1.bf16.msra.mxu0 0
    %446 = vmatprep.subr.bf16.mxu0 0
    %447 = vmatpush1.bf16.msra.mxu0 0
    %448 = vmatprep.subr.bf16.mxu0 0
    %449 = vmatpush1.bf16.msra.mxu0 0
    %450 = vmatprep.subr.bf16.mxu0 0
    %451 = vmatpush1.bf16.msra.mxu0 0
    %452 = vmatprep.subr.bf16.mxu0 0
    %453 = vmatpush1.bf16.msra.mxu0 0
    %454 = vmatprep.subr.bf16.mxu0 0
    %455 = vmatpush1.bf16.msra.mxu0 0
    %456 = vmatprep.subr.bf16.mxu0 0
    %457 = vmatpush1.bf16.msra.mxu0 0
    %458 = vmatprep.subr.bf16.mxu0 0
    %459 = vmatpush1.bf16.msra.mxu0 0
    %460 = vmatprep.subr.bf16.mxu0 0
    %461 = vmatpush1.bf16.msra.mxu0 0
    %462 = vmatprep.subr.bf16.mxu0 0
    %463 = vmatpush1.bf16.msra.mxu0 0
    %464 = vmatprep.mubr.bf16.mxu0 0
    %465 = vmatmul.mubr.bf16.gmra.mrb[0].mxu0 %v348
    %v466 = vpop.f32.mrb[0].mxu0
    %v467 = vadd.f32 %v289, %v466
    %v468 = vpop.f32.mrb[0].mxu0
    %v469 = vadd.f32 %v289, %v468
    %v470 = vpop.f32.mrb[0].mxu0
    %v471 = vadd.f32 %v294, %v470
    %v472 = vpop.f32.mrb[0].mxu0
    %v473 = vadd.f32 %v294, %v472
    %474 = vmatprep.mubr.bf16.mxu0 0
    %475 = vmatmul.mubr.bf16.gmra.mrb[0].mxu0 %v351
    %v476 = vpop.f32.mrb[0].mxu0
    %v477 = vadd.f32 %v299, %v476
    %v478 = vpop.f32.mrb[0].mxu0
    %v479 = vadd.f32 %v299, %v478
    %v480 = vpop.f32.mrb[0].mxu0
    %v481 = vadd.f32 %v304, %v480
    %v482 = vpop.f32.mrb[0].mxu0
    %v483 = vadd.f32 %v304, %v482
    %484 = vmatprep.mubr.bf16.mxu0 0
    %485 = vmatmul.mubr.bf16.gmra.mrb[0].mxu0 %v354
    %v486 = vpop.f32.mrb[0].mxu0
    %v487 = vadd.f32 %v309, %v486
    %v488 = vpop.f32.mrb[0].mxu0
    %v489 = vadd.f32 %v309, %v488
    %v490 = vpop.f32.mrb[0].mxu0
    %v491 = vadd.f32 %v314, %v490
    %v492 = vpop.f32.mrb[0].mxu0
    %v493 = vadd.f32 %v314, %v492
    %494 = vmatprep.mubr.bf16.mxu0 0
    %495 = vmatmul.mubr.bf16.gmra.mrb[0].mxu0 %v357
    %v496 = vpop.f32.mrb[0].mxu0
    %v497 = vadd.f32 %v319, %v496
    %v498 = vpop.f32.mrb[0].mxu0
    %v499 = vadd.f32 %v319, %v498
    %v500 = vpop.f32.mrb[0].mxu0
    %v501 = vadd.f32 %v324, %v500
    %v502 = vpop.f32.mrb[0].mxu0
    %v503 = vadd.f32 %v324, %v502
    %504 = vdwg.mxu0
    %505 = vst [vmem:[#allocation2] sm:$0xff] %v394
    %506 = vst [vmem:[#allocation2 + $0x8] sm:$0xff] %v396
    %507 = vst [vmem:[#allocation2 + $0x10] sm:$0xff] %v467
    %508 = vst [vmem:[#allocation2 + $0x18] sm:$0xff] %v469
    %509 = vst [vmem:[#allocation2 + $0x20] sm:$0xff] %v398
    %510 = vst [vmem:[#allocation2 + $0x28] sm:$0xff] %v400
    %511 = vst [vmem:[#allocation2 + $0x30] sm:$0xff] %v471
    %512 = vst [vmem:[#allocation2 + $0x38] sm:$0xff] %v473
    %513 = vst [vmem:[#allocation2 + $0x40] sm:$0xff] %v404
    %514 = vst [vmem:[#allocation2 + $0x48] sm:$0xff] %v406
    %515 = vst [vmem:[#allocation2 + $0x50] sm:$0xff] %v477
    %516 = vst [vmem:[#allocation2 + $0x58] sm:$0xff] %v479
    %517 = vst [vmem:[#allocation2 + $0x60] sm:$0xff] %v408
    %518 = vst [vmem:[#allocation2 + $0x68] sm:$0xff] %v410
    %519 = vst [vmem:[#allocation2 + $0x70] sm:$0xff] %v481
    %520 = vst [vmem:[#allocation2 + $0x78] sm:$0xff] %v483
    %521 = vst [vmem:[#allocation2 + $0x80] sm:$0xff] %v414
    %522 = vst [vmem:[#allocation2 + $0x88] sm:$0xff] %v416
    %523 = vst [vmem:[#allocation2 + $0x90] sm:$0xff] %v487
    %524 = vst [vmem:[#allocation2 + $0x98] sm:$0xff] %v489
    %525 = vst [vmem:[#allocation2 + $0xa0] sm:$0xff] %v418
    %526 = vst [vmem:[#allocation2 + $0xa8] sm:$0xff] %v420
    %527 = vst [vmem:[#allocation2 + $0xb0] sm:$0xff] %v491
    %528 = vst [vmem:[#allocation2 + $0xb8] sm:$0xff] %v493
    %529 = vst [vmem:[#allocation2 + $0xc0] sm:$0xff] %v424
    %530 = vst [vmem:[#allocation2 + $0xc8] sm:$0xff] %v426
    %531 = vst [vmem:[#allocation2 + $0xd0] sm:$0xff] %v497
    %532 = vst [vmem:[#allocation2 + $0xd8] sm:$0xff] %v499
    %533 = vst [vmem:[#allocation2 + $0xe0] sm:$0xff] %v428
    %534 = vst [vmem:[#allocation2 + $0xe8] sm:$0xff] %v430
    %535 = vst [vmem:[#allocation2 + $0xf0] sm:$0xff] %v501
    %536 = vst [vmem:[#allocation2 + $0xf8] sm:$0xff] %v503
    // Predicated region
    $region22: #{tpu_custom_call.1} parent=1 // pred_check
      _
    $region23: #{tpu_custom_call.1} parent=1 // pred_check_branch
      %538 = sbr.rel (0) target = $region25
    $region24: #{tpu_custom_call.1} parent=1 // pred_region
      %s540 = ssub.s32 4096, 4096
      %541 = vsyncadd [#allocation3], %s540
      %s542 = sshll.u32 [#allocation2], 4
      %s543 = int_to_ptr.vmem [resolvable:$true] %s542
      %548 = dma.vmem_to_hbm [thread:$0]  %s543, 4096, %s5, [#allocation3], 512, 512, 32
    $region25: #{tpu_custom_call.1} parent=1 // pred_fallthru
      _
    // Predicated region
    $region26: #{tpu_custom_call.1} parent=1 // pred_check
      _
    $region27: #{tpu_custom_call.1} parent=1 // pred_check_branch
      %550 = sbr.rel (0) target = $region29
    $region28: #{tpu_custom_call.1} parent=1 // pred_region
      %551 = dma.done [#allocation3], 4096
    $region29: #{tpu_custom_call.1} parent=1 // pred_fallthru
      _
    %552 = vsyncpa [#allocation3], 1

</llo_original>
